<compile_context>
chip_gen: v5e
topology: v5e:2x2
jax: 0.10.0
libtpu: 0.0.40
codegen_flags: <defaults>
</compile_context>

<pallas_src>
import jax
import jax.numpy as jnp
from jax.experimental import pallas as pl
from jax.experimental.pallas import tpu as pltpu

_LANE = 128
_SUBLANE = 8


def _head_kernel(x_ref, w1_ref, b1_ref, w2_ref, b2_ref, o_ref):
    # dense: x @ W1   (W1 pre-transposed at load time to (in, out) layout)
    x = x_ref[...].astype(jnp.bfloat16)
    h = jnp.dot(x, w1_ref[...], preferred_element_type=jnp.float32)
    h = jnp.tanh(h + b1_ref[...])                      # bias add + tanh in f32
    # out_proj: h @ W2   (W2 pre-transposed + lane-padded to a 128-wide output slab)
    y = jnp.dot(h.astype(jnp.bfloat16), w2_ref[...], preferred_element_type=jnp.float32)
    o_ref[...] = (y + b2_ref[...]).astype(o_ref.dtype)


def prepare_head_params(dense_w, dense_b, out_w, out_b):
    """One-time (load-time) parameter prep.  Do NOT call per forward step.

    dense_w: (H, H) PyTorch (out, in) layout    dense_b: (H,)
    out_w:   (L, H) PyTorch (out, in) layout    out_b:   (L,)
    Returns (w1, b1, w2, b2) ready for wav2vec2_classification_head().
    """
    H = dense_w.shape[1]
    L = out_w.shape[0]
    Lp = max(_LANE, pl.cdiv(L, _LANE) * _LANE)                      # lane-dense width
    w1 = jnp.asarray(dense_w).T.astype(jnp.bfloat16)                # (H, H) (in, out)
    b1 = jnp.asarray(dense_b).reshape(1, H).astype(jnp.float32)     # (1, H)
    w2 = jnp.zeros((H, Lp), jnp.bfloat16).at[:, :L].set(
        jnp.asarray(out_w).T.astype(jnp.bfloat16))                  # (H, Lp) (in, out), padded
    b2 = jnp.zeros((1, Lp), jnp.float32).at[0, :L].set(
        jnp.asarray(out_b).astype(jnp.float32))                     # (1, Lp), padded
    return w1, b1, w2, b2


def wav2vec2_classification_head(features, w1, b1, w2, b2, *, num_labels,
                                 block_b=512):
    """features: (B, H) float32 or bfloat16
       w1,b1,w2,b2: outputs of prepare_head_params()
       returns (B, num_labels) float32 logits
    """
    B, H = features.shape
    Lp = w2.shape[1]
    assert block_b % _SUBLANE == 0, "block_b must be a multiple of 8"

    # Batch tiling — no materialized zero-pad copy of features.
    #  * B <= block_b: single block equal to the full batch dim (always legal).
    #  * B  > block_b: tiles of block_b rows; the tail is a partial block, Pallas
    #    pads OOB loads and drops OOB stores.  Tune block_b so the grid length is
    #    >= 4 on v7x for good megacore sharding.
    tb = B if B <= block_b else block_b
    grid = pl.cdiv(B, tb)

    x_bytes = jnp.dtype(features.dtype).itemsize
    flops = 2 * B * H * (H + Lp)
    bytes_accessed = (B * H * x_bytes          # features
                      + H * H * 2 + H * Lp * 2 # bf16 weights
                      + (H + Lp) * 4           # biases
                      + B * Lp * 4)            # output
    # VMEM budget: x / out tiles double-buffered, params single-buffered (resident).
    vmem_bytes = (2 * tb * H * x_bytes + 2 * tb * Lp * 4
                  + H * H * 2 + H * Lp * 2 + (H + Lp) * 4)
    vmem_limit = None
    if vmem_bytes > 30 * 1024 * 1024:
        vmem_limit = int(min(2 * vmem_bytes, 100 * 1024 * 1024))

    resident = dict(pipeline_mode=pl.Buffered(1))   # single-buffer constant-index params

    out = pl.pallas_call(
        _head_kernel,
        out_shape=jax.ShapeDtypeStruct((B, Lp), jnp.float32),
        grid_spec=pltpu.PrefetchScalarGridSpec(
            num_scalar_prefetch=0,
            grid=(grid,),
            in_specs=[
                pl.BlockSpec((tb, H), lambda i: (i, 0)),              # x tile (double-buffered)
                pl.BlockSpec((H, H), lambda i: (0, 0), **resident),   # dense W   (resident)
                pl.BlockSpec((1, H), lambda i: (0, 0), **resident),   # dense b   (resident)
                pl.BlockSpec((H, Lp), lambda i: (0, 0), **resident),  # out_proj W (resident, padded)
                pl.BlockSpec((1, Lp), lambda i: (0, 0), **resident),  # out_proj b (resident, padded)
            ],
            out_specs=pl.BlockSpec((tb, Lp), lambda i: (i, 0)),
        ),
        compiler_params=pltpu.CompilerParams(
            dimension_semantics=("parallel",),       # shard batch tiles across TCs (v7x)
            vmem_limit_bytes=vmem_limit),
        cost_estimate=pl.CostEstimate(
            flops=flops, transcendentals=B * H, bytes_accessed=bytes_accessed),
    )(features, w1, b1, w2, b2)

    return out[:, :num_labels]


def _reference_f32(features, dense_w, dense_b, out_w, out_b):
    h = jnp.tanh(features @ dense_w.T + dense_b)
    return h @ out_w.T + out_b


def _reference_bf16(features, dense_w, dense_b, out_w, out_b):
    # Mirrors the kernel's precision: bf16 MXU inputs, f32 accumulation / elementwise.
    h = jnp.dot(features.astype(jnp.bfloat16), dense_w.T.astype(jnp.bfloat16),
                preferred_element_type=jnp.float32)
    h = jnp.tanh(h + dense_b)
    y = jnp.dot(h.astype(jnp.bfloat16), out_w.T.astype(jnp.bfloat16),
                preferred_element_type=jnp.float32)
    return y + out_b


if __name__ == "__main__":
    # config: hidden_size=32, num_labels=8, batch=4 (small, consistent w/ head)
    B, H, L = 4, 32, 8
    key = jax.random.PRNGKey(0)
    k_x, k_w1, k_b1, k_w2, k_b2 = jax.random.split(key, 5)

    features = jax.random.normal(k_x, (B, H), dtype=jnp.float32)
    dense_w = jax.random.normal(k_w1, (H, H), dtype=jnp.float32) * 0.1
    dense_b = jax.random.normal(k_b1, (H,), dtype=jnp.float32) * 0.1
    out_w = jax.random.normal(k_w2, (L, H), dtype=jnp.float32) * 0.1
    out_b = jax.random.normal(k_b2, (L,), dtype=jnp.float32) * 0.1

    # Param prep happens ONCE (load time), not per step.
    params = prepare_head_params(dense_w, dense_b, out_w, out_b)

    out = wav2vec2_classification_head(features, *params, num_labels=L)
    out = jax.block_until_ready(out)

    ref_bf16 = _reference_bf16(features, dense_w, dense_b, out_w, out_b)
    ref_f32 = _reference_f32(features, dense_w, dense_b, out_w, out_b)

    assert out.shape == (B, L), out.shape
    assert jnp.allclose(out, ref_bf16, atol=1e-3, rtol=1e-3), "mismatch vs bf16-matched reference"
    assert jnp.allclose(out, ref_f32, atol=3e-2, rtol=3e-2), "mismatch vs f32 reference"

    print("KERNEL_OK")
</pallas_src>

<mosaic_0001>
module attributes {stable_mosaic.version = 11 : i64} {
  func.func @_head_kernel(%arg0: i32, %arg1: memref<4x32xf32, #tpu.memory_space<vmem>>, %arg2: memref<32x32xbf16, #tpu.memory_space<vmem>>, %arg3: memref<1x32xf32, #tpu.memory_space<vmem>>, %arg4: memref<32x128xbf16, #tpu.memory_space<vmem>>, %arg5: memref<1x128xf32, #tpu.memory_space<vmem>>, %arg6: memref<4x128xf32, #tpu.memory_space<vmem>>) attributes {dimension_semantics = [#tpu.dimension_semantics<parallel>], iteration_bounds = array<i64: 1>, scalar_prefetch = 0 : i64, scratch_operands = 0 : i64, tpu.core_type = #tpu.core_type<tc>, window_params = [{transform_indices = @transform_0, window_bounds = array<i64: 4, 32>}, {pipeline_mode = #tpu.pipeline_mode<synchronous>, transform_indices = @transform_1, window_bounds = array<i64: 32, 32>}, {pipeline_mode = #tpu.pipeline_mode<synchronous>, transform_indices = @transform_2, window_bounds = array<i64: 1, 32>}, {pipeline_mode = #tpu.pipeline_mode<synchronous>, transform_indices = @transform_3, window_bounds = array<i64: 32, 128>}, {pipeline_mode = #tpu.pipeline_mode<synchronous>, transform_indices = @transform_4, window_bounds = array<i64: 1, 128>}, {transform_indices = @transform_5, window_bounds = array<i64: 4, 128>}]} {
    %c0 = arith.constant 0 : index
    %c0_0 = arith.constant 0 : index
    %0 = vector.load %arg1[%c0, %c0_0] : memref<4x32xf32, #tpu.memory_space<vmem>>, vector<4x32xf32>
    %1 = arith.truncf %0 : vector<4x32xf32> to vector<4x32xbf16>
    %c0_1 = arith.constant 0 : index
    %c0_2 = arith.constant 0 : index
    %2 = vector.load %arg2[%c0_1, %c0_2] : memref<32x32xbf16, #tpu.memory_space<vmem>>, vector<32x32xbf16>
    %cst = arith.constant dense<0.000000e+00> : vector<4x32xf32>
    %3 = tpu.matmul %1, %2, %cst {dimension_numbers = #tpu.dot_dimension_numbers<[1], [0], [0], [1], [0, 0, 1, 1], [], []>} : vector<4x32xbf16>, vector<32x32xbf16>, vector<4x32xf32> -> vector<4x32xf32>
    %c0_3 = arith.constant 0 : index
    %c0_4 = arith.constant 0 : index
    %4 = vector.load %arg3[%c0_3, %c0_4] : memref<1x32xf32, #tpu.memory_space<vmem>>, vector<1x32xf32>
    %5 = vector.broadcast %4 : vector<1x32xf32> to vector<4x32xf32>
    %6 = arith.addf %3, %5 : vector<4x32xf32>
    %7 = math.tanh %6 : vector<4x32xf32>
    %8 = arith.truncf %7 : vector<4x32xf32> to vector<4x32xbf16>
    %c0_5 = arith.constant 0 : index
    %c0_6 = arith.constant 0 : index
    %9 = vector.load %arg4[%c0_5, %c0_6] : memref<32x128xbf16, #tpu.memory_space<vmem>>, vector<32x128xbf16>
    %cst_7 = arith.constant dense<0.000000e+00> : vector<4x128xf32>
    %10 = tpu.matmul %8, %9, %cst_7 {dimension_numbers = #tpu.dot_dimension_numbers<[1], [0], [0], [1], [0, 0, 1, 1], [], []>} : vector<4x32xbf16>, vector<32x128xbf16>, vector<4x128xf32> -> vector<4x128xf32>
    %c0_8 = arith.constant 0 : index
    %c0_9 = arith.constant 0 : index
    %11 = vector.load %arg5[%c0_8, %c0_9] : memref<1x128xf32, #tpu.memory_space<vmem>>, vector<1x128xf32>
    %12 = vector.broadcast %11 : vector<1x128xf32> to vector<4x128xf32>
    %13 = arith.addf %10, %12 : vector<4x128xf32>
    %c0_10 = arith.constant 0 : index
    %c0_11 = arith.constant 0 : index
    %14 = vector.load %arg6[%c0_10, %c0_11] : memref<4x128xf32, #tpu.memory_space<vmem>>, vector<4x128xf32>
    tpu.vector_store %arg6[%c0_10, %c0_11], %13 {strides = array<i32>} : memref<4x128xf32, #tpu.memory_space<vmem>>, vector<4x128xf32>,
    return
  }
  func.func @transform_0(%arg0: i32) -> (i32, i32) {
    %c0_i32 = arith.constant 0 : i32
    %c0_i32_0 = arith.constant 0 : i32
    return %arg0, %c0_i32 : i32, i32
  }
  func.func @transform_1(%arg0: i32) -> (i32, i32) {
    %c0_i32 = arith.constant 0 : i32
    %c0_i32_0 = arith.constant 0 : i32
    %c0_i32_1 = arith.constant 0 : i32
    return %c0_i32, %c0_i32_0 : i32, i32
  }
  func.func @transform_2(%arg0: i32) -> (i32, i32) {
    %c0_i32 = arith.constant 0 : i32
    %c0_i32_0 = arith.constant 0 : i32
    %c0_i32_1 = arith.constant 0 : i32
    return %c0_i32, %c0_i32_0 : i32, i32
  }
  func.func @transform_3(%arg0: i32) -> (i32, i32) {
    %c0_i32 = arith.constant 0 : i32
    %c0_i32_0 = arith.constant 0 : i32
    %c0_i32_1 = arith.constant 0 : i32
    return %c0_i32, %c0_i32_0 : i32, i32
  }
  func.func @transform_4(%arg0: i32) -> (i32, i32) {
    %c0_i32 = arith.constant 0 : i32
    %c0_i32_0 = arith.constant 0 : i32
    %c0_i32_1 = arith.constant 0 : i32
    return %c0_i32, %c0_i32_0 : i32, i32
  }
  func.func @transform_5(%arg0: i32) -> (i32, i32) {
    %c0_i32 = arith.constant 0 : i32
    %c0_i32_0 = arith.constant 0 : i32
    return %arg0, %c0_i32 : i32, i32
  }
}

</mosaic_0001>

<llo_original>
// kernel: tpu_custom_call.1
$region0: #{tpu_custom_call.1}
  #allocation0 [shape = 'u32[]', space=smem, size = 0x4, offset = 0x4, fixed_abs, tag = 'smem constant byte address 0x4 - core index']
  #allocation1 [shape = 'u32[72,128]{1,0:T(1,128)}', space=vmem, size = 0x9000, scoped, tag = 'internal scratch']
  %s0 = inlined_call_operand.hbm [shape: f32[4,32], index: 0, kind: input, shape index: {}]
  %s1 = inlined_call_operand.hbm [shape: bf16[32,32], index: 1, kind: input, shape index: {}]
  %s2 = inlined_call_operand.vmem [shape: f32[1,32], index: 2, kind: input, shape index: {}]
  %s3 = inlined_call_operand.hbm [shape: bf16[32,128], index: 3, kind: input, shape index: {}]
  %s4 = inlined_call_operand.vmem [shape: f32[1,128], index: 4, kind: input, shape index: {}]
  %s5 = inlined_call_operand.hbm [shape: f32[4,128], index: 5, kind: output, shape index: {}]
  %s6 = sld [smem:[#allocation0]]
  $region42: #{tpu_custom_call.1} parent=0
    _
  %s8 = ssub.s32 1, %s6
  %s9 = scalar_select 0, %s8, %s6
  $region1: #{tpu_custom_call.1} parent=0
    #allocation2 [shape = 'u8[2048]{0}', space=vmem, size = 0x800, scoped, tag = 'input window, operand 0, single buffered']
    #allocation3 [shape = 's32[1]{0}', space=sflag, size = 0x4, scoped, tag = 'scoped memory for tpu_custom_call.1']
    #allocation4 [shape = 's32[1]{0}', space=sflag, size = 0x4, scoped, tag = 'scoped memory for tpu_custom_call.1']
    #allocation5 [shape = 'u8[8192]{0}', space=vmem, size = 0x2000, scoped, tag = 'input window, operand 1, single buffered']
    #allocation6 [shape = 's32[1]{0}', space=sflag, size = 0x4, scoped, tag = 'scoped memory for tpu_custom_call.1']
    #allocation7 [shape = 'u8[8192]{0}', space=vmem, size = 0x2000, scoped, tag = 'input window, operand 3, single buffered']
    #allocation8 [shape = 'u8[2048]{0}', space=vmem, size = 0x800, scoped, tag = 'output window, operand 0, single buffered']
    %10 = vsyncpa [#allocation3], 0
    %11 = vsyncpa [#allocation6], 0
    %12 = vsyncpa [#allocation4], 0
    // Predicated region
    $region2: #{tpu_custom_call.1} parent=1 // pred_check
      _
    $region3: #{tpu_custom_call.1} parent=1 // pred_check_branch
      %14 = sbr.rel (0) target = $region5
    $region4: #{tpu_custom_call.1} parent=1 // pred_region
      %16 = vsyncadd [#allocation3], 0
      %s18 = sshll.u32 %s0, 4
      %s19 = int_to_ptr.hbm [resolvable:$true] %s18
      %s20 = sshll.u32 [#allocation2], 4
      %s21 = int_to_ptr.vmem [resolvable:$true] %s20
      %23 = dma.hbm_to_vmem [thread:$0]  %s19, 64, %s21, [#allocation3]
    $region5: #{tpu_custom_call.1} parent=1 // pred_fallthru
      _
    // Predicated region
    $region6: #{tpu_custom_call.1} parent=1 // pred_check
      _
    $region7: #{tpu_custom_call.1} parent=1 // pred_check_branch
      %25 = sbr.rel (0) target = $region9
    $region8: #{tpu_custom_call.1} parent=1 // pred_region
      %27 = vsyncadd [#allocation6], 0
      %s28 = sshll.u32 %s1, 4
      %s29 = int_to_ptr.hbm [resolvable:$true] %s28
      %s30 = sshll.u32 [#allocation5], 4
      %s31 = int_to_ptr.vmem [resolvable:$true] %s30
      %36 = dma.hbm_to_vmem [thread:$0]  %s29, 256, %s31, [#allocation6], 64, 64, 4
    $region9: #{tpu_custom_call.1} parent=1 // pred_fallthru
      _
    // Predicated region
    $region10: #{tpu_custom_call.1} parent=1 // pred_check
      _
    $region11: #{tpu_custom_call.1} parent=1 // pred_check_branch
      %38 = sbr.rel (0) target = $region13
    $region12: #{tpu_custom_call.1} parent=1 // pred_region
      _
    $region13: #{tpu_custom_call.1} parent=1 // pred_fallthru
      _
    // Predicated region
    $region14: #{tpu_custom_call.1} parent=1 // pred_check
      _
    $region15: #{tpu_custom_call.1} parent=1 // pred_check_branch
      %40 = sbr.rel (0) target = $region17
    $region16: #{tpu_custom_call.1} parent=1 // pred_region
      %42 = vsyncadd [#allocation6], 0
      %s43 = sshll.u32 %s3, 4
      %s44 = int_to_ptr.hbm [resolvable:$true] %s43
      %s45 = sshll.u32 [#allocation7], 4
      %s46 = int_to_ptr.vmem [resolvable:$true] %s45
      %51 = dma.hbm_to_vmem [thread:$0]  %s44, 256, %s46, [#allocation6], 64, 64, 4
    $region17: #{tpu_custom_call.1} parent=1 // pred_fallthru
      _
    // Predicated region
    $region18: #{tpu_custom_call.1} parent=1 // pred_check
      _
    $region19: #{tpu_custom_call.1} parent=1 // pred_check_branch
      %53 = sbr.rel (0) target = $region21
    $region20: #{tpu_custom_call.1} parent=1 // pred_region
      _
    $region21: #{tpu_custom_call.1} parent=1 // pred_fallthru
      _
    // Predicated region
    $region22: #{tpu_custom_call.1} parent=1 // pred_check
      _
    $region23: #{tpu_custom_call.1} parent=1 // pred_check_branch
      %55 = sbr.rel (0) target = $region25
    $region24: #{tpu_custom_call.1} parent=1 // pred_region
      %57 = dma.done [#allocation3], 64
    $region25: #{tpu_custom_call.1} parent=1 // pred_fallthru
      _
    // Predicated region
    $region26: #{tpu_custom_call.1} parent=1 // pred_check
      _
    $region27: #{tpu_custom_call.1} parent=1 // pred_check_branch
      %59 = sbr.rel (0) target = $region29
    $region28: #{tpu_custom_call.1} parent=1 // pred_region
      %61 = dma.done [#allocation6], 256
    $region29: #{tpu_custom_call.1} parent=1 // pred_fallthru
      _
    // Predicated region
    $region30: #{tpu_custom_call.1} parent=1 // pred_check
      _
    $region31: #{tpu_custom_call.1} parent=1 // pred_check_branch
      %63 = sbr.rel (0) target = $region33
    $region32: #{tpu_custom_call.1} parent=1 // pred_region
      %65 = dma.done [#allocation6], 256
    $region33: #{tpu_custom_call.1} parent=1 // pred_fallthru
      _
    %v67 = vld [vmem:[#allocation2] sm:$0xf]
    %v68 = vpack.c.bf16 %v67, %v67
    %v69 = vld [vmem:[#allocation5] sm:$0xf]
    %v70 = vld [vmem:[#allocation5 + $0x4] sm:$0xf]
    %v71 = vld [vmem:[#allocation5 + $0x8] sm:$0xf]
    %v72 = vld [vmem:[#allocation5 + $0xc] sm:$0xf]
    %v73 = vld [vmem:[%s2] sm:$0x1]
    %v75 = vperm.slane %v73, 0
    %v81 = vunpack.c.l.b16 %v69
    %v82 = vunpack.c.l.b16 %v70
    %v83 = vunpack.c.l.b16 %v71
    %v84 = vunpack.c.l.b16 %v72
    %v85 = vpack.c.b16 %v82, %v81
    %v86 = vpack.c.b16 %v84, %v83
    %vm89 = vcmask 261120
    %v91 = vsel %vm89, %v68, 0
    %93 = vmatpush.bf16.msra.mxu0 0
    %94 = vmatpush.bf16.msra.mxu0 0
    %95 = vmatpush.bf16.msra.mxu0 0
    %96 = vmatpush.bf16.msra.mxu0 0
    %97 = vmatpush.bf16.msra.mxu0 0
    %98 = vmatpush.bf16.msra.mxu0 0
    %99 = vmatpush.bf16.msra.mxu0 %v86
    %100 = vmatpush.bf16.msra.mxu0 %v85
    %101 = vmatmul.bf16.gmra.mxu0 %v91
    %v102 = vpop.f32.mrf.mxu0
    %v103 = vadd.f32 %v75, %v102
    %v104 = vpop.f32.mrf.mxu0
    %105 = vdwg.mxu0
    %v106 = vtanh.pop %v103
    %v107 = vpack.c.bf16 %v106, %v106
    %v108 = vld [vmem:[#allocation7] sm:$0xf]
    %v109 = vld [vmem:[#allocation7 + $0x4] sm:$0xf]
    %v110 = vld [vmem:[#allocation7 + $0x8] sm:$0xf]
    %v111 = vld [vmem:[#allocation7 + $0xc] sm:$0xf]
    %v112 = vld [vmem:[%s4] sm:$0x1]
    %v114 = vperm.slane %v112, 0
    %v120 = vunpack.c.l.b16 %v108
    %v121 = vunpack.c.l.b16 %v109
    %v122 = vunpack.c.l.b16 %v110
    %v123 = vunpack.c.l.b16 %v111
    %v124 = vpack.c.b16 %v121, %v120
    %v125 = vpack.c.b16 %v123, %v122
    %v129 = vsel %vm89, %v107, 0
    %131 = vmatpush.bf16.msra.mxu0 0
    %132 = vmatpush.bf16.msra.mxu0 0
    %133 = vmatpush.bf16.msra.mxu0 0
    %134 = vmatpush.bf16.msra.mxu0 0
    %135 = vmatpush.bf16.msra.mxu0 0
    %136 = vmatpush.bf16.msra.mxu0 0
    %137 = vmatpush.bf16.msra.mxu0 %v125
    %138 = vmatpush.bf16.msra.mxu0 %v124
    %139 = vmatmul.bf16.gmra.mxu0 %v129
    %v140 = vpop.f32.mrf.mxu0
    %v141 = vadd.f32 %v114, %v140
    %v142 = vpop.f32.mrf.mxu0
    %143 = vdwg.mxu0
    %144 = vst [vmem:[#allocation8] sm:$0xf] %v141
    // Predicated region
    $region34: #{tpu_custom_call.1} parent=1 // pred_check
      _
    $region35: #{tpu_custom_call.1} parent=1 // pred_check_branch
      %146 = sbr.rel (0) target = $region37
    $region36: #{tpu_custom_call.1} parent=1 // pred_region
      %148 = vsyncadd [#allocation4], 0
      %s150 = sshll.u32 [#allocation8], 4
      %s151 = int_to_ptr.vmem [resolvable:$true] %s150
      %s152 = sshll.u32 %s5, 4
      %s153 = int_to_ptr.hbm [resolvable:$true] %s152
      %155 = dma.vmem_to_hbm [thread:$0]  %s151, 64, %s153, [#allocation4]
    $region37: #{tpu_custom_call.1} parent=1 // pred_fallthru
      _
    // Predicated region
    $region38: #{tpu_custom_call.1} parent=1 // pred_check
      _
    $region39: #{tpu_custom_call.1} parent=1 // pred_check_branch
      %157 = sbr.rel (0) target = $region41
    $region40: #{tpu_custom_call.1} parent=1 // pred_region
      %159 = dma.done [#allocation4], 64
    $region41: #{tpu_custom_call.1} parent=1 // pred_fallthru
      _
    %160 = vsyncpa [#allocation3], 1
    %161 = vsyncpa [#allocation6], 1
    %162 = vsyncpa [#allocation4], 1

</llo_original>
